<compile_context>
chip_gen: v5e
topology: v5e:2x2
jax: 0.10.0
libtpu: 0.0.40
codegen_flags: <defaults>
</compile_context>

<pallas_src>
import jax
import jax.numpy as jnp
from jax import lax
from jax.experimental import pallas as pl
from jax.experimental.pallas import tpu as pltpu

EPS = 1e-5  # torch.nn.BatchNorm2d default eps


def _residual_block_kernel(xe_ref, mask_ref, wb1_ref, wb2_ref, p_ref, m_ref,
                           o_ref, h1e_scr):
    NPe, WC = xe_ref.shape          # NPe = N*(H+2) + 2 extended rows
    NP = NPe - 2                    # inner rows (incl. per-batch H-pad rows)

    mask = mask_ref[...]            # (NP, 1) f32: 1 for real rows, 0 for pad

    def conv3x3(src_bf, wb_ref):
        # src_bf: (NPe, WC) bf16 full extended slab (no per-window slicing or
        # casting of the source).  wb_ref[kh] is (W*Cin, W*Cout) with the
        # W-direction "same" padding baked into the band; the H direction is
        # handled by slicing the f32 *results* at row offsets kh = 0, 1, 2.
        y = jnp.dot(src_bf, wb_ref[0],
                    preferred_element_type=jnp.float32)[0:NP, :]
        y = y + jnp.dot(src_bf, wb_ref[1],
                        preferred_element_type=jnp.float32)[1:NP + 1, :]
        y = y + jnp.dot(src_bf, wb_ref[2],
                        preferred_element_type=jnp.float32)[2:NP + 2, :]
        return y

    def batchnorm(y, gamma, beta):
        # Training-mode BN, sum-first: reduce rows in full f32 (VPU/XLU), then
        # mix the W lane-groups of the tiny reduced (1, WC) row with m_ref
        # (per-channel sums broadcast back to every lane of that channel,
        # 1/(N*H*W) folded in).  Pad rows are masked out of both statistics.
        # TODO(synk): replace the m_ref matmul with log2(W) strided
        # pltpu.roll(+add) on the reduced row to drop the (WC, WC) operand.
        sum_row = jnp.sum(y * mask, axis=0, keepdims=True)
        mean = jnp.dot(sum_row, m_ref[...],
                       preferred_element_type=jnp.float32)
        d = y - mean
        dm = d * mask
        var_row = jnp.sum(dm * dm, axis=0, keepdims=True)
        var = jnp.dot(var_row, m_ref[...],
                      preferred_element_type=jnp.float32)
        return d * lax.rsqrt(var + EPS) * gamma + beta

    xe = xe_ref[...]                             # (NPe, WC) f32, loaded once
    xe_bf = xe.astype(jnp.bfloat16)              # single hoisted cast (conv1)

    # --- conv1 -> BN1 -> ReLU ---
    h1 = jnp.maximum(
        batchnorm(conv3x3(xe_bf, wb1_ref), p_ref[0:1, :], p_ref[1:2, :]), 0.0)

    # Stage h1 (pad rows zeroed by the mask so they act as conv2's H padding)
    # through an extended scratch; only the two outer border rows are zeroed
    # explicitly, the interior is written once with full-width stores.
    # TODO(synk): stage the scratch in bf16 once packed-dtype unaligned
    # sublane stores are verified on the target toolchain (halves footprint).
    h1e_scr[0:1, :] = jnp.zeros((1, WC), jnp.float32)
    h1e_scr[NP + 1:NP + 2, :] = jnp.zeros((1, WC), jnp.float32)
    h1e_scr[1:NP + 1, :] = h1 * mask

    # --- conv2 -> BN2 ---
    h1e_bf = h1e_scr[...].astype(jnp.bfloat16)   # single hoisted cast (conv2)
    h2 = batchnorm(conv3x3(h1e_bf, wb2_ref), p_ref[2:3, :], p_ref[3:4, :])

    # --- residual add + ReLU; residual = inner rows of the extended input.
    #     Pad rows carry finite garbage and are sliced off by the wrapper. ---
    o_ref[...] = jnp.maximum(h2 + xe[1:NP + 1, :], 0.0)


def _band_weights(w_hwio, width):
    """HWIO (3,3,Cin,Cout) -> (3, W*Cin, W*Cout) block-banded matmul operands.

    band[kh][win*Cin+ci, wout*Cout+co] = w[kh, win-wout+1, ci, co] when
    |win - wout| <= 1, else 0 -- i.e. the W-direction 'same' padding of the
    3x3 conv is baked directly into the weight matrix.
    """
    _, _, cin, cout = w_hwio.shape
    win = jnp.arange(width)[:, None]
    wout = jnp.arange(width)[None, :]
    kw = win - wout + 1                                   # (W, W)
    valid = (kw >= 0) & (kw <= 2)
    g = w_hwio[:, jnp.clip(kw, 0, 2)]                     # (3, W, W, Cin, Cout)
    g = jnp.where(valid[None, :, :, None, None], g, 0.0)
    return jnp.transpose(g, (0, 1, 3, 2, 4)).reshape(3, width * cin,
                                                     width * cout)


def _tile_row(v, width):
    """Per-channel (..,C) vector -> (1, W*C) row matching the lane-dense layout."""
    return jnp.tile(jnp.reshape(v, (1, -1)), (1, width)).astype(jnp.float32)


def _channel_mean_matrix(width, cout, nhw):
    """(W*C, W*C): right-multiplying the reduced (1, W*C) row by this yields
    per-channel sums broadcast back to every lane of that channel, with
    1/(N*H*W) folded in."""
    idx = jnp.arange(width * cout)
    same = (idx[:, None] % cout) == (idx[None, :] % cout)
    return same.astype(jnp.float32) * (1.0 / float(nhw))


def residual_block(x_nchw, params):
    """x_nchw: (N, C, H, W) float32. Returns (N, C, H, W) float32."""
    x = jnp.transpose(x_nchw, (0, 2, 3, 1)).astype(jnp.float32)   # NHWC
    N, H, W, Cin = x.shape
    Cout = params["w1"].shape[-1]
    assert Cin == Cout, "ResidualBlock residual add requires in_ch == out_ch"
    WC = W * Cout
    P = H + 2
    NP = N * P

    # Extended lane-dense slab: per-batch H padding plus one extra zero row at
    # each end of the flattened slab, so every conv H-window is a plain slice.
    # x is DMA'd exactly once; the residual is its interior inside the kernel.
    # TODO(synk): in a real pipeline keep activations lane-dense NHWC between
    # layers and fold this padding/transposition into the producer.
    xpb = jnp.pad(x.reshape(N, H, W * Cin), ((0, 0), (1, 1), (0, 0)))
    xe = jnp.pad(xpb.reshape(NP, WC), ((1, 1), (0, 0)))

    # 0/1 mask of real (non-pad) rows; excludes pad rows from the BN stats.
    r = jnp.arange(NP) % P
    mask = ((r >= 1) & (r <= H)).astype(jnp.float32)[:, None]

    wb1 = _band_weights(params["w1"], W).astype(jnp.bfloat16)
    wb2 = _band_weights(params["w2"], W).astype(jnp.bfloat16)
    # Conv biases b1/b2 are omitted: they cancel exactly under training-mode
    # BN (y - mean).  gamma/beta rows of both BNs packed into one operand.
    prows = jnp.concatenate([_tile_row(params["g1"], W),
                             _tile_row(params["be1"], W),
                             _tile_row(params["g2"], W),
                             _tile_row(params["be2"], W)], axis=0)
    mred = _channel_mean_matrix(W, Cout, N * H * W)

    operands = (xe, mask, wb1, wb2, prows, mred)
    out_bytes = NP * WC * 4
    scratch_bytes = (NP + 2) * WC * 4
    need = sum(int(a.size) * a.dtype.itemsize for a in operands) \
        + out_bytes + scratch_bytes
    vmem_limit = int(min(max(2 * need + (2 << 20), 16 << 20), 64 << 20))

    vm = pl.BlockSpec(memory_space=pltpu.MemorySpace.VMEM)
    # TODO(synk): for large activations, grid over N*(row-block) with
    # dimension_semantics=("parallel",) and a two-pass BN (accumulate
    # per-channel sum/sumsq across blocks, then normalize) so the kernel
    # pipelines and uses both TensorCores on v7x; whole-batch residency is
    # fine at these demo shapes.
    out2d = pl.pallas_call(
        _residual_block_kernel,
        out_shape=jax.ShapeDtypeStruct((NP, WC), jnp.float32),
        in_specs=[vm] * len(operands),
        out_specs=vm,
        scratch_shapes=[pltpu.VMEM((NP + 2, WC), jnp.float32)],
        compiler_params=pltpu.CompilerParams(vmem_limit_bytes=vmem_limit),
    )(*operands)

    out = out2d.reshape(N, P, W, Cout)[:, 1:H + 1]        # drop pad rows
    return jnp.transpose(out, (0, 3, 1, 2))               # back to NCHW


def residual_block_reference(x_nchw, p):
    """Pure-JAX reference with the same precision policy (bf16 conv operands,
    f32 accumulation / BN / residual) for correctness checking.  Includes the
    conv biases, which cancel under training-mode BN."""
    x = jnp.transpose(x_nchw, (0, 2, 3, 1)).astype(jnp.float32)

    def conv(h, w, b):
        y = lax.conv_general_dilated(
            h.astype(jnp.bfloat16), w.astype(jnp.bfloat16), (1, 1), "SAME",
            dimension_numbers=("NHWC", "HWIO", "NHWC"),
            preferred_element_type=jnp.float32)
        return y + b.reshape(1, 1, 1, -1)

    def bn(y, g, be):
        m = jnp.mean(y, axis=(0, 1, 2), keepdims=True)
        v = jnp.mean((y - m) ** 2, axis=(0, 1, 2), keepdims=True)
        return (y - m) * lax.rsqrt(v + EPS) * g.reshape(1, 1, 1, -1) \
            + be.reshape(1, 1, 1, -1)

    h = jax.nn.relu(bn(conv(x, p["w1"], p["b1"]), p["g1"], p["be1"]))
    h = bn(conv(h, p["w2"], p["b2"]), p["g2"], p["be2"])
    return jnp.transpose(jax.nn.relu(h + x), (0, 3, 1, 2))


def init_params(key, in_ch, out_ch):
    ks = jax.random.split(key, 8)
    # Conv weights stored directly in HWIO; deterministic synthetic init.
    w1 = 0.1 * jax.random.normal(ks[0], (3, 3, in_ch, out_ch), jnp.float32)
    b1 = 0.1 * jax.random.normal(ks[1], (1, out_ch), jnp.float32)
    g1 = 1.0 + 0.1 * jax.random.normal(ks[2], (1, out_ch), jnp.float32)
    be1 = 0.1 * jax.random.normal(ks[3], (1, out_ch), jnp.float32)
    w2 = 0.1 * jax.random.normal(ks[4], (3, 3, out_ch, out_ch), jnp.float32)
    b2 = 0.1 * jax.random.normal(ks[5], (1, out_ch), jnp.float32)
    g2 = 1.0 + 0.1 * jax.random.normal(ks[6], (1, out_ch), jnp.float32)
    be2 = 0.1 * jax.random.normal(ks[7], (1, out_ch), jnp.float32)
    return dict(w1=w1, b1=b1, g1=g1, be1=be1, w2=w2, b2=b2, g2=g2, be2=be2)


if __name__ == "__main__":
    key = jax.random.PRNGKey(0)
    k_x, k_p = jax.random.split(key)

    N, C, H, W = 2, 8, 16, 16            # in_ch == out_ch == 8; W*C = 128 lanes
    x = jax.random.normal(k_x, (N, C, H, W), jnp.float32)
    params = init_params(k_p, C, C)

    out = jax.block_until_ready(residual_block(x, params))
    ref = jax.block_until_ready(residual_block_reference(x, params))

    # Kernel and reference both use bf16 MXU conv operands, but round the
    # conv2 input from f32 intermediates that differ at ~1e-7, so isolated
    # elements can land on different bf16 ulps; the tolerance covers that
    # (structural bugs would show up as O(0.1..1) deviations).
    if not jnp.allclose(out, ref, atol=2e-2, rtol=2e-2):
        raise AssertionError("Pallas kernel does not match JAX reference")

    print("KERNEL_OK")
</pallas_src>

<mosaic_0001>
module attributes {stable_mosaic.version = 11 : i64} {
  func.func @_residual_block_kernel(%arg0: memref<38x128xf32, #tpu.memory_space<vmem>>, %arg1: memref<36x1xf32, #tpu.memory_space<vmem>>, %arg2: memref<3x128x128xbf16, #tpu.memory_space<vmem>>, %arg3: memref<3x128x128xbf16, #tpu.memory_space<vmem>>, %arg4: memref<4x128xf32, #tpu.memory_space<vmem>>, %arg5: memref<128x128xf32, #tpu.memory_space<vmem>>, %arg6: memref<36x128xf32, #tpu.memory_space<vmem>>, %arg7: memref<38x128xf32, #tpu.memory_space<vmem>>) attributes {dimension_semantics = [], scalar_prefetch = 0 : i64, scratch_operands = 1 : i64, tpu.core_type = #tpu.core_type<tc>} {
    %c0 = arith.constant 0 : index
    %c0_0 = arith.constant 0 : index
    %0 = vector.load %arg1[%c0, %c0_0] : memref<36x1xf32, #tpu.memory_space<vmem>>, vector<36x1xf32>
    %c0_1 = arith.constant 0 : index
    %c0_2 = arith.constant 0 : index
    %1 = vector.load %arg0[%c0_1, %c0_2] : memref<38x128xf32, #tpu.memory_space<vmem>>, vector<38x128xf32>
    %2 = arith.truncf %1 : vector<38x128xf32> to vector<38x128xbf16>
    %c0_3 = arith.constant 0 : index
    %c0_4 = arith.constant 0 : index
    %c0_5 = arith.constant 0 : index
    %3 = vector.load %arg2[%c0_3, %c0_4, %c0_5] : memref<3x128x128xbf16, #tpu.memory_space<vmem>>, vector<1x128x128xbf16>
    %4 = vector.shape_cast %3 : vector<1x128x128xbf16> to vector<128x128xbf16>
    %cst = arith.constant dense<0.000000e+00> : vector<38x128xf32>
    %5 = tpu.matmul %2, %4, %cst {dimension_numbers = #tpu.dot_dimension_numbers<[1], [0], [0], [1], [0, 0, 1, 1], [], []>} : vector<38x128xbf16>, vector<128x128xbf16>, vector<38x128xf32> -> vector<38x128xf32>
    %6 = vector.extract_strided_slice %5 {offsets = [0, 0], sizes = [36, 128], strides = [1, 1]} : vector<38x128xf32> to vector<36x128xf32>
    %c1 = arith.constant 1 : index
    %c0_6 = arith.constant 0 : index
    %c0_7 = arith.constant 0 : index
    %7 = vector.load %arg2[%c1, %c0_6, %c0_7] : memref<3x128x128xbf16, #tpu.memory_space<vmem>>, vector<1x128x128xbf16>
    %8 = vector.shape_cast %7 : vector<1x128x128xbf16> to vector<128x128xbf16>
    %cst_8 = arith.constant dense<0.000000e+00> : vector<38x128xf32>
    %9 = tpu.matmul %2, %8, %cst_8 {dimension_numbers = #tpu.dot_dimension_numbers<[1], [0], [0], [1], [0, 0, 1, 1], [], []>} : vector<38x128xbf16>, vector<128x128xbf16>, vector<38x128xf32> -> vector<38x128xf32>
    %10 = vector.extract_strided_slice %9 {offsets = [1, 0], sizes = [36, 128], strides = [1, 1]} : vector<38x128xf32> to vector<36x128xf32>
    %11 = arith.addf %6, %10 : vector<36x128xf32>
    %c2 = arith.constant 2 : index
    %c0_9 = arith.constant 0 : index
    %c0_10 = arith.constant 0 : index
    %12 = vector.load %arg2[%c2, %c0_9, %c0_10] : memref<3x128x128xbf16, #tpu.memory_space<vmem>>, vector<1x128x128xbf16>
    %13 = vector.shape_cast %12 : vector<1x128x128xbf16> to vector<128x128xbf16>
    %cst_11 = arith.constant dense<0.000000e+00> : vector<38x128xf32>
    %14 = tpu.matmul %2, %13, %cst_11 {dimension_numbers = #tpu.dot_dimension_numbers<[1], [0], [0], [1], [0, 0, 1, 1], [], []>} : vector<38x128xbf16>, vector<128x128xbf16>, vector<38x128xf32> -> vector<38x128xf32>
    %15 = vector.extract_strided_slice %14 {offsets = [2, 0], sizes = [36, 128], strides = [1, 1]} : vector<38x128xf32> to vector<36x128xf32>
    %16 = arith.addf %11, %15 : vector<36x128xf32>
    %c0_12 = arith.constant 0 : index
    %c0_13 = arith.constant 0 : index
    %17 = vector.load %arg4[%c0_12, %c0_13] : memref<4x128xf32, #tpu.memory_space<vmem>>, vector<1x128xf32>
    %c1_14 = arith.constant 1 : index
    %c0_15 = arith.constant 0 : index
    %18 = vector.load %arg4[%c1_14, %c0_15] : memref<4x128xf32, #tpu.memory_space<vmem>>, vector<1x128xf32>
    %19 = vector.broadcast %0 : vector<36x1xf32> to vector<36x128xf32>
    %20 = arith.mulf %16, %19 : vector<36x128xf32>
    %cst_16 = arith.constant dense<0.000000e+00> : vector<128xf32>
    %21 = vector.multi_reduction <add>, %20, %cst_16 [0] : vector<36x128xf32> to vector<128xf32>
    %22 = vector.shape_cast %21 : vector<128xf32> to vector<1x128xf32>
    %c0_17 = arith.constant 0 : index
    %c0_18 = arith.constant 0 : index
    %23 = vector.load %arg5[%c0_17, %c0_18] : memref<128x128xf32, #tpu.memory_space<vmem>>, vector<128x128xf32>
    %cst_19 = arith.constant dense<0.000000e+00> : vector<1x128xf32>
    %24 = tpu.matmul %22, %23, %cst_19 {dimension_numbers = #tpu.dot_dimension_numbers<[1], [0], [0], [1], [0, 0, 1, 1], [], []>} : vector<1x128xf32>, vector<128x128xf32>, vector<1x128xf32> -> vector<1x128xf32>
    %25 = vector.broadcast %24 : vector<1x128xf32> to vector<36x128xf32>
    %26 = arith.subf %16, %25 : vector<36x128xf32>
    %27 = vector.broadcast %0 : vector<36x1xf32> to vector<36x128xf32>
    %28 = arith.mulf %26, %27 : vector<36x128xf32>
    %29 = arith.mulf %28, %28 : vector<36x128xf32>
    %cst_20 = arith.constant dense<0.000000e+00> : vector<128xf32>
    %30 = vector.multi_reduction <add>, %29, %cst_20 [0] : vector<36x128xf32> to vector<128xf32>
    %31 = vector.shape_cast %30 : vector<128xf32> to vector<1x128xf32>
    %c0_21 = arith.constant 0 : index
    %c0_22 = arith.constant 0 : index
    %32 = vector.load %arg5[%c0_21, %c0_22] : memref<128x128xf32, #tpu.memory_space<vmem>>, vector<128x128xf32>
    %cst_23 = arith.constant dense<0.000000e+00> : vector<1x128xf32>
    %33 = tpu.matmul %31, %32, %cst_23 {dimension_numbers = #tpu.dot_dimension_numbers<[1], [0], [0], [1], [0, 0, 1, 1], [], []>} : vector<1x128xf32>, vector<128x128xf32>, vector<1x128xf32> -> vector<1x128xf32>
    %cst_24 = arith.constant 9.99999974E-6 : f32
    %34 = vector.broadcast %cst_24 : f32 to vector<1x128xf32>
    %35 = arith.addf %33, %34 : vector<1x128xf32>
    %36 = math.rsqrt %35 : vector<1x128xf32>
    %37 = vector.broadcast %36 : vector<1x128xf32> to vector<36x128xf32>
    %38 = arith.mulf %26, %37 : vector<36x128xf32>
    %39 = vector.broadcast %17 : vector<1x128xf32> to vector<36x128xf32>
    %40 = arith.mulf %38, %39 : vector<36x128xf32>
    %41 = vector.broadcast %18 : vector<1x128xf32> to vector<36x128xf32>
    %42 = arith.addf %40, %41 : vector<36x128xf32>
    %cst_25 = arith.constant 0.000000e+00 : f32
    %43 = vector.broadcast %cst_25 : f32 to vector<36x128xf32>
    %44 = arith.maximumf %42, %43 : vector<36x128xf32>
    %cst_26 = arith.constant 0.000000e+00 : f32
    %45 = vector.broadcast %cst_26 : f32 to vector<1x128xf32>
    %c0_27 = arith.constant 0 : index
    %c0_28 = arith.constant 0 : index
    %46 = vector.load %arg7[%c0_27, %c0_28] : memref<38x128xf32, #tpu.memory_space<vmem>>, vector<1x128xf32>
    tpu.vector_store %arg7[%c0_27, %c0_28], %45 {strides = array<i32>} : memref<38x128xf32, #tpu.memory_space<vmem>>, vector<1x128xf32>,
    %cst_29 = arith.constant 0.000000e+00 : f32
    %47 = vector.broadcast %cst_29 : f32 to vector<1x128xf32>
    %c37 = arith.constant 37 : index
    %c0_30 = arith.constant 0 : index
    %48 = vector.load %arg7[%c37, %c0_30] : memref<38x128xf32, #tpu.memory_space<vmem>>, vector<1x128xf32>
    tpu.vector_store %arg7[%c37, %c0_30], %47 {strides = array<i32>} : memref<38x128xf32, #tpu.memory_space<vmem>>, vector<1x128xf32>,
    %49 = vector.broadcast %0 : vector<36x1xf32> to vector<36x128xf32>
    %50 = arith.mulf %44, %49 : vector<36x128xf32>
    %c1_31 = arith.constant 1 : index
    %c0_32 = arith.constant 0 : index
    %51 = vector.load %arg7[%c1_31, %c0_32] : memref<38x128xf32, #tpu.memory_space<vmem>>, vector<36x128xf32>
    tpu.vector_store %arg7[%c1_31, %c0_32], %50 {strides = array<i32>} : memref<38x128xf32, #tpu.memory_space<vmem>>, vector<36x128xf32>,
    %c0_33 = arith.constant 0 : index
    %c0_34 = arith.constant 0 : index
    %52 = vector.load %arg7[%c0_33, %c0_34] : memref<38x128xf32, #tpu.memory_space<vmem>>, vector<38x128xf32>
    %53 = arith.truncf %52 : vector<38x128xf32> to vector<38x128xbf16>
    %c0_35 = arith.constant 0 : index
    %c0_36 = arith.constant 0 : index
    %c0_37 = arith.constant 0 : index
    %54 = vector.load %arg3[%c0_35, %c0_36, %c0_37] : memref<3x128x128xbf16, #tpu.memory_space<vmem>>, vector<1x128x128xbf16>
    %55 = vector.shape_cast %54 : vector<1x128x128xbf16> to vector<128x128xbf16>
    %cst_38 = arith.constant dense<0.000000e+00> : vector<38x128xf32>
    %56 = tpu.matmul %53, %55, %cst_38 {dimension_numbers = #tpu.dot_dimension_numbers<[1], [0], [0], [1], [0, 0, 1, 1], [], []>} : vector<38x128xbf16>, vector<128x128xbf16>, vector<38x128xf32> -> vector<38x128xf32>
    %57 = vector.extract_strided_slice %56 {offsets = [0, 0], sizes = [36, 128], strides = [1, 1]} : vector<38x128xf32> to vector<36x128xf32>
    %c1_39 = arith.constant 1 : index
    %c0_40 = arith.constant 0 : index
    %c0_41 = arith.constant 0 : index
    %58 = vector.load %arg3[%c1_39, %c0_40, %c0_41] : memref<3x128x128xbf16, #tpu.memory_space<vmem>>, vector<1x128x128xbf16>
    %59 = vector.shape_cast %58 : vector<1x128x128xbf16> to vector<128x128xbf16>
    %cst_42 = arith.constant dense<0.000000e+00> : vector<38x128xf32>
    %60 = tpu.matmul %53, %59, %cst_42 {dimension_numbers = #tpu.dot_dimension_numbers<[1], [0], [0], [1], [0, 0, 1, 1], [], []>} : vector<38x128xbf16>, vector<128x128xbf16>, vector<38x128xf32> -> vector<38x128xf32>
    %61 = vector.extract_strided_slice %60 {offsets = [1, 0], sizes = [36, 128], strides = [1, 1]} : vector<38x128xf32> to vector<36x128xf32>
    %62 = arith.addf %57, %61 : vector<36x128xf32>
    %c2_43 = arith.constant 2 : index
    %c0_44 = arith.constant 0 : index
    %c0_45 = arith.constant 0 : index
    %63 = vector.load %arg3[%c2_43, %c0_44, %c0_45] : memref<3x128x128xbf16, #tpu.memory_space<vmem>>, vector<1x128x128xbf16>
    %64 = vector.shape_cast %63 : vector<1x128x128xbf16> to vector<128x128xbf16>
    %cst_46 = arith.constant dense<0.000000e+00> : vector<38x128xf32>
    %65 = tpu.matmul %53, %64, %cst_46 {dimension_numbers = #tpu.dot_dimension_numbers<[1], [0], [0], [1], [0, 0, 1, 1], [], []>} : vector<38x128xbf16>, vector<128x128xbf16>, vector<38x128xf32> -> vector<38x128xf32>
    %66 = vector.extract_strided_slice %65 {offsets = [2, 0], sizes = [36, 128], strides = [1, 1]} : vector<38x128xf32> to vector<36x128xf32>
    %67 = arith.addf %62, %66 : vector<36x128xf32>
    %c2_47 = arith.constant 2 : index
    %c0_48 = arith.constant 0 : index
    %68 = vector.load %arg4[%c2_47, %c0_48] : memref<4x128xf32, #tpu.memory_space<vmem>>, vector<1x128xf32>
    %c3 = arith.constant 3 : index
    %c0_49 = arith.constant 0 : index
    %69 = vector.load %arg4[%c3, %c0_49] : memref<4x128xf32, #tpu.memory_space<vmem>>, vector<1x128xf32>
    %70 = vector.broadcast %0 : vector<36x1xf32> to vector<36x128xf32>
    %71 = arith.mulf %67, %70 : vector<36x128xf32>
    %cst_50 = arith.constant dense<0.000000e+00> : vector<128xf32>
    %72 = vector.multi_reduction <add>, %71, %cst_50 [0] : vector<36x128xf32> to vector<128xf32>
    %73 = vector.shape_cast %72 : vector<128xf32> to vector<1x128xf32>
    %c0_51 = arith.constant 0 : index
    %c0_52 = arith.constant 0 : index
    %74 = vector.load %arg5[%c0_51, %c0_52] : memref<128x128xf32, #tpu.memory_space<vmem>>, vector<128x128xf32>
    %cst_53 = arith.constant dense<0.000000e+00> : vector<1x128xf32>
    %75 = tpu.matmul %73, %74, %cst_53 {dimension_numbers = #tpu.dot_dimension_numbers<[1], [0], [0], [1], [0, 0, 1, 1], [], []>} : vector<1x128xf32>, vector<128x128xf32>, vector<1x128xf32> -> vector<1x128xf32>
    %76 = vector.broadcast %75 : vector<1x128xf32> to vector<36x128xf32>
    %77 = arith.subf %67, %76 : vector<36x128xf32>
    %78 = vector.broadcast %0 : vector<36x1xf32> to vector<36x128xf32>
    %79 = arith.mulf %77, %78 : vector<36x128xf32>
    %80 = arith.mulf %79, %79 : vector<36x128xf32>
    %cst_54 = arith.constant dense<0.000000e+00> : vector<128xf32>
    %81 = vector.multi_reduction <add>, %80, %cst_54 [0] : vector<36x128xf32> to vector<128xf32>
    %82 = vector.shape_cast %81 : vector<128xf32> to vector<1x128xf32>
    %c0_55 = arith.constant 0 : index
    %c0_56 = arith.constant 0 : index
    %83 = vector.load %arg5[%c0_55, %c0_56] : memref<128x128xf32, #tpu.memory_space<vmem>>, vector<128x128xf32>
    %cst_57 = arith.constant dense<0.000000e+00> : vector<1x128xf32>
    %84 = tpu.matmul %82, %83, %cst_57 {dimension_numbers = #tpu.dot_dimension_numbers<[1], [0], [0], [1], [0, 0, 1, 1], [], []>} : vector<1x128xf32>, vector<128x128xf32>, vector<1x128xf32> -> vector<1x128xf32>
    %cst_58 = arith.constant 9.99999974E-6 : f32
    %85 = vector.broadcast %cst_58 : f32 to vector<1x128xf32>
    %86 = arith.addf %84, %85 : vector<1x128xf32>
    %87 = math.rsqrt %86 : vector<1x128xf32>
    %88 = vector.broadcast %87 : vector<1x128xf32> to vector<36x128xf32>
    %89 = arith.mulf %77, %88 : vector<36x128xf32>
    %90 = vector.broadcast %68 : vector<1x128xf32> to vector<36x128xf32>
    %91 = arith.mulf %89, %90 : vector<36x128xf32>
    %92 = vector.broadcast %69 : vector<1x128xf32> to vector<36x128xf32>
    %93 = arith.addf %91, %92 : vector<36x128xf32>
    %94 = vector.extract_strided_slice %1 {offsets = [1, 0], sizes = [36, 128], strides = [1, 1]} : vector<38x128xf32> to vector<36x128xf32>
    %95 = arith.addf %93, %94 : vector<36x128xf32>
    %cst_59 = arith.constant 0.000000e+00 : f32
    %96 = vector.broadcast %cst_59 : f32 to vector<36x128xf32>
    %97 = arith.maximumf %95, %96 : vector<36x128xf32>
    %c0_60 = arith.constant 0 : index
    %c0_61 = arith.constant 0 : index
    %98 = vector.load %arg6[%c0_60, %c0_61] : memref<36x128xf32, #tpu.memory_space<vmem>>, vector<36x128xf32>
    tpu.vector_store %arg6[%c0_60, %c0_61], %97 {strides = array<i32>} : memref<36x128xf32, #tpu.memory_space<vmem>>, vector<36x128xf32>,
    return
  }
}

</mosaic_0001>

<llo_original>
// kernel: tpu_custom_call.1
$region0: #{tpu_custom_call.1}
  #allocation0 [shape = 'u32[]', space=smem, size = 0x4, offset = 0x4, fixed_abs, tag = 'smem constant byte address 0x4 - core index']
  #allocation1 [shape = 'u32[72,128]{1,0:T(1,128)}', space=vmem, size = 0x9000, scoped, tag = 'internal scratch']
  #allocation2 [shape = 'f32[38,128]{1,0:T(8,128)}', space=vmem, size = 0x5000, scoped, tag = 'scratch operand']
  %s0 = inlined_call_operand.vmem [shape: f32[38,128], index: 0, kind: input, shape index: {}]
  %s1 = inlined_call_operand.vmem [shape: f32[36,1], index: 1, kind: input, shape index: {}]
  %s2 = inlined_call_operand.hbm [shape: bf16[3,128,128], index: 2, kind: input, shape index: {}]
  %s3 = inlined_call_operand.hbm [shape: bf16[3,128,128], index: 3, kind: input, shape index: {}]
  %s4 = inlined_call_operand.vmem [shape: f32[4,128], index: 4, kind: input, shape index: {}]
  %s5 = inlined_call_operand.hbm [shape: f32[128,128], index: 5, kind: input, shape index: {}]
  %s6 = inlined_call_operand.hbm [shape: f32[36,128], index: 6, kind: output, shape index: {}]
  %s7 = sld [smem:[#allocation0]]
  $region46: #{tpu_custom_call.1} parent=0
    _
  %s9 = ssub.s32 1, %s7
  %s10 = scalar_select 0, %s9, %s7
  $region1: #{tpu_custom_call.1} parent=0
    #allocation3 [shape = 'u8[98304]{0}', space=vmem, size = 0x18000, scoped, tag = 'input window, operand 2, single buffered']
    #allocation4 [shape = 's32[1]{0}', space=sflag, size = 0x4, scoped, tag = 'scoped memory for tpu_custom_call.1']
    #allocation5 [shape = 's32[1]{0}', space=sflag, size = 0x4, scoped, tag = 'scoped memory for tpu_custom_call.1']
    #allocation6 [shape = 'u8[98304]{0}', space=vmem, size = 0x18000, scoped, tag = 'input window, operand 3, single buffered']
    #allocation7 [shape = 's32[1]{0}', space=sflag, size = 0x4, scoped, tag = 'scoped memory for tpu_custom_call.1']
    #allocation8 [shape = 'u8[65536]{0}', space=vmem, size = 0x10000, scoped, tag = 'input window, operand 5, single buffered']
    #allocation9 [shape = 'u8[20480]{0}', space=vmem, size = 0x5000, scoped, tag = 'output window, operand 0, single buffered']
    %11 = vsyncpa [#allocation4], 0
    %12 = vsyncpa [#allocation7], 0
    %13 = vsyncpa [#allocation5], 0
    // Predicated region
    $region2: #{tpu_custom_call.1} parent=1 // pred_check
      _
    $region3: #{tpu_custom_call.1} parent=1 // pred_check_branch
      %15 = sbr.rel (0) target = $region5
    $region4: #{tpu_custom_call.1} parent=1 // pred_region
      _
    $region5: #{tpu_custom_call.1} parent=1 // pred_fallthru
      _
    // Predicated region
    $region6: #{tpu_custom_call.1} parent=1 // pred_check
      _
    $region7: #{tpu_custom_call.1} parent=1 // pred_check_branch
      %17 = sbr.rel (0) target = $region9
    $region8: #{tpu_custom_call.1} parent=1 // pred_region
      _
    $region9: #{tpu_custom_call.1} parent=1 // pred_fallthru
      _
    // Predicated region
    $region10: #{tpu_custom_call.1} parent=1 // pred_check
      _
    $region11: #{tpu_custom_call.1} parent=1 // pred_check_branch
      %19 = sbr.rel (0) target = $region13
    $region12: #{tpu_custom_call.1} parent=1 // pred_region
      %21 = vsyncadd [#allocation4], 0
      %s22 = sshll.u32 %s2, 4
      %s23 = int_to_ptr.hbm [resolvable:$true] %s22
      %s24 = sshll.u32 [#allocation3], 4
      %s25 = int_to_ptr.vmem [resolvable:$true] %s24
      %30 = dma.hbm_to_vmem [thread:$0]  %s23, 3072, %s25, [#allocation4], 64, 64, 4
    $region13: #{tpu_custom_call.1} parent=1 // pred_fallthru
      _
    // Predicated region
    $region14: #{tpu_custom_call.1} parent=1 // pred_check
      _
    $region15: #{tpu_custom_call.1} parent=1 // pred_check_branch
      %32 = sbr.rel (0) target = $region17
    $region16: #{tpu_custom_call.1} parent=1 // pred_region
      %34 = vsyncadd [#allocation7], 0
      %s35 = sshll.u32 %s3, 4
      %s36 = int_to_ptr.hbm [resolvable:$true] %s35
      %s37 = sshll.u32 [#allocation6], 4
      %s38 = int_to_ptr.vmem [resolvable:$true] %s37
      %43 = dma.hbm_to_vmem [thread:$0]  %s36, 3072, %s38, [#allocation7], 64, 64, 4
    $region17: #{tpu_custom_call.1} parent=1 // pred_fallthru
      _
    // Predicated region
    $region18: #{tpu_custom_call.1} parent=1 // pred_check
      _
    $region19: #{tpu_custom_call.1} parent=1 // pred_check_branch
      %45 = sbr.rel (0) target = $region21
    $region20: #{tpu_custom_call.1} parent=1 // pred_region
      _
    $region21: #{tpu_custom_call.1} parent=1 // pred_fallthru
      _
    // Predicated region
    $region22: #{tpu_custom_call.1} parent=1 // pred_check
      _
    $region23: #{tpu_custom_call.1} parent=1 // pred_check_branch
      %47 = sbr.rel (0) target = $region25
    $region24: #{tpu_custom_call.1} parent=1 // pred_region
      %49 = vsyncadd [#allocation7], 0
      %s50 = sshll.u32 %s5, 4
      %s51 = int_to_ptr.hbm [resolvable:$true] %s50
      %s52 = sshll.u32 [#allocation8], 4
      %s53 = int_to_ptr.vmem [resolvable:$true] %s52
      %58 = dma.hbm_to_vmem [thread:$0]  %s51, 2048, %s53, [#allocation7], 128, 128, 8
    $region25: #{tpu_custom_call.1} parent=1 // pred_fallthru
      _
    // Predicated region
    $region26: #{tpu_custom_call.1} parent=1 // pred_check
      _
    $region27: #{tpu_custom_call.1} parent=1 // pred_check_branch
      %60 = sbr.rel (0) target = $region29
    $region28: #{tpu_custom_call.1} parent=1 // pred_region
      %62 = dma.done [#allocation4], 3072
    $region29: #{tpu_custom_call.1} parent=1 // pred_fallthru
      _
    // Predicated region
    $region30: #{tpu_custom_call.1} parent=1 // pred_check
      _
    $region31: #{tpu_custom_call.1} parent=1 // pred_check_branch
      %64 = sbr.rel (0) target = $region33
    $region32: #{tpu_custom_call.1} parent=1 // pred_region
      %66 = dma.done [#allocation7], 3072
    $region33: #{tpu_custom_call.1} parent=1 // pred_fallthru
      _
    // Predicated region
    $region34: #{tpu_custom_call.1} parent=1 // pred_check
      _
    $region35: #{tpu_custom_call.1} parent=1 // pred_check_branch
      %68 = sbr.rel (0) target = $region37
    $region36: #{tpu_custom_call.1} parent=1 // pred_region
      %70 = dma.done [#allocation7], 2048
    $region37: #{tpu_custom_call.1} parent=1 // pred_fallthru
      _
    %v71 = vld [vmem:[%s1] sm:$0xff]
    %v72 = vld [vmem:[%s1 + $0x8] sm:$0xff]
    %v73 = vld [vmem:[%s1 + $0x10] sm:$0xff]
    %v74 = vld [vmem:[%s1 + $0x18] sm:$0xff]
    %v75 = vld [vmem:[%s1 + $0x20] sm:$0xf]
    %v76 = vld [vmem:[%s0] sm:$0xff]
    %v77 = vld [vmem:[%s0 + $0x8] sm:$0xff]
    %v78 = vld [vmem:[%s0 + $0x10] sm:$0xff]
    %v79 = vld [vmem:[%s0 + $0x18] sm:$0xff]
    %v80 = vld [vmem:[%s0 + $0x20] sm:$0x3f]
    %v81 = vpack.c.bf16 %v77, %v76
    %v82 = vpack.c.bf16 %v79, %v78
    %v83 = vpack.c.bf16 %v80, %v80
    %v84 = vld [vmem:[#allocation3] sm:$0xf]
    %v85 = vld [vmem:[#allocation3 + $0x4] sm:$0xf]
    %v86 = vld [vmem:[#allocation3 + $0x8] sm:$0xf]
    %v87 = vld [vmem:[#allocation3 + $0xc] sm:$0xf]
    %v88 = vld [vmem:[#allocation3 + $0x10] sm:$0xf]
    %v89 = vld [vmem:[#allocation3 + $0x14] sm:$0xf]
    %v90 = vld [vmem:[#allocation3 + $0x18] sm:$0xf]
    %v91 = vld [vmem:[#allocation3 + $0x1c] sm:$0xf]
    %v92 = vld [vmem:[#allocation3 + $0x20] sm:$0xf]
    %v93 = vld [vmem:[#allocation3 + $0x24] sm:$0xf]
    %v94 = vld [vmem:[#allocation3 + $0x28] sm:$0xf]
    %v95 = vld [vmem:[#allocation3 + $0x2c] sm:$0xf]
    %v96 = vld [vmem:[#allocation3 + $0x30] sm:$0xf]
    %v97 = vld [vmem:[#allocation3 + $0x34] sm:$0xf]
    %v98 = vld [vmem:[#allocation3 + $0x38] sm:$0xf]
    %v99 = vld [vmem:[#allocation3 + $0x3c] sm:$0xf]
    %v116 = vunpack.c.l.b16 %v84
    %v117 = vunpack.c.l.b16 %v85
    %v118 = vunpack.c.l.b16 %v86
    %v119 = vunpack.c.l.b16 %v87
    %v120 = vunpack.c.l.b16 %v88
    %v121 = vunpack.c.l.b16 %v89
    %v122 = vunpack.c.l.b16 %v90
    %v123 = vunpack.c.l.b16 %v91
    %v124 = vunpack.c.l.b16 %v92
    %v125 = vunpack.c.l.b16 %v93
    %v126 = vunpack.c.l.b16 %v94
    %v127 = vunpack.c.l.b16 %v95
    %v128 = vunpack.c.l.b16 %v96
    %v129 = vunpack.c.l.b16 %v97
    %v130 = vunpack.c.l.b16 %v98
    %v131 = vunpack.c.l.b16 %v99
    %v132 = vpack.c.b16 %v117, %v116
    %v133 = vpack.c.b16 %v119, %v118
    %v134 = vpack.c.b16 %v121, %v120
    %v135 = vpack.c.b16 %v123, %v122
    %v136 = vpack.c.b16 %v125, %v124
    %v137 = vpack.c.b16 %v127, %v126
    %v138 = vpack.c.b16 %v129, %v128
    %v139 = vpack.c.b16 %v131, %v130
    %148 = vmatpush.bf16.msra.mxu0 %v139
    %149 = vmatpush.bf16.msra.mxu0 %v138
    %150 = vmatpush.bf16.msra.mxu0 %v137
    %151 = vmatpush.bf16.msra.mxu0 %v136
    %152 = vmatpush.bf16.msra.mxu0 %v135
    %153 = vmatpush.bf16.msra.mxu0 %v134
    %154 = vmatpush.bf16.msra.mxu0 %v133
    %155 = vmatpush.bf16.msra.mxu0 %v132
    %156 = vmatmul.bf16.gmra.mxu0 %v81
    %v157 = vpop.f32.mrf.mxu0
    %v158 = vadd.f32 0.0, %v157
    %v159 = vpop.f32.mrf.mxu0
    %v160 = vadd.f32 0.0, %v159
    %161 = vmatmul.bf16.gmra.mxu0 %v82
    %v162 = vpop.f32.mrf.mxu0
    %v163 = vadd.f32 0.0, %v162
    %v164 = vpop.f32.mrf.mxu0
    %v165 = vadd.f32 0.0, %v164
    %166 = vmatmul.bf16.gmra.mxu0 %v83
    %v167 = vpop.f32.mrf.mxu0
    %v168 = vadd.f32 0.0, %v167
    %v169 = vpop.f32.mrf.mxu0
    %170 = vdwg.mxu0
    %s171 = scalar_lea.vmem [#allocation3], 64
    %v172 = vld [vmem:[%s171] sm:$0xf]
    %v173 = vld [vmem:[%s171 + $0x4] sm:$0xf]
    %v174 = vld [vmem:[%s171 + $0x8] sm:$0xf]
    %v175 = vld [vmem:[%s171 + $0xc] sm:$0xf]
    %v176 = vld [vmem:[%s171 + $0x10] sm:$0xf]
    %v177 = vld [vmem:[%s171 + $0x14] sm:$0xf]
    %v178 = vld [vmem:[%s171 + $0x18] sm:$0xf]
    %v179 = vld [vmem:[%s171 + $0x1c] sm:$0xf]
    %v180 = vld [vmem:[%s171 + $0x20] sm:$0xf]
    %v181 = vld [vmem:[%s171 + $0x24] sm:$0xf]
    %v182 = vld [vmem:[%s171 + $0x28] sm:$0xf]
    %v183 = vld [vmem:[%s171 + $0x2c] sm:$0xf]
    %v184 = vld [vmem:[%s171 + $0x30] sm:$0xf]
    %v185 = vld [vmem:[%s171 + $0x34] sm:$0xf]
    %v186 = vld [vmem:[%s171 + $0x38] sm:$0xf]
    %v187 = vld [vmem:[%s171 + $0x3c] sm:$0xf]
    %v204 = vunpack.c.l.b16 %v172
    %v205 = vunpack.c.l.b16 %v173
    %v206 = vunpack.c.l.b16 %v174
    %v207 = vunpack.c.l.b16 %v175
    %v208 = vunpack.c.l.b16 %v176
    %v209 = vunpack.c.l.b16 %v177
    %v210 = vunpack.c.l.b16 %v178
    %v211 = vunpack.c.l.b16 %v179
    %v212 = vunpack.c.l.b16 %v180
    %v213 = vunpack.c.l.b16 %v181
    %v214 = vunpack.c.l.b16 %v182
    %v215 = vunpack.c.l.b16 %v183
    %v216 = vunpack.c.l.b16 %v184
    %v217 = vunpack.c.l.b16 %v185
    %v218 = vunpack.c.l.b16 %v186
    %v219 = vunpack.c.l.b16 %v187
    %v220 = vpack.c.b16 %v205, %v204
    %v221 = vpack.c.b16 %v207, %v206
    %v222 = vpack.c.b16 %v209, %v208
    %v223 = vpack.c.b16 %v211, %v210
    %v224 = vpack.c.b16 %v213, %v212
    %v225 = vpack.c.b16 %v215, %v214
    %v226 = vpack.c.b16 %v217, %v216
    %v227 = vpack.c.b16 %v219, %v218
    %236 = vmatpush.bf16.msra.mxu0 %v227
    %237 = vmatpush.bf16.msra.mxu0 %v226
    %238 = vmatpush.bf16.msra.mxu0 %v225
    %239 = vmatpush.bf16.msra.mxu0 %v224
    %240 = vmatpush.bf16.msra.mxu0 %v223
    %241 = vmatpush.bf16.msra.mxu0 %v222
    %242 = vmatpush.bf16.msra.mxu0 %v221
    %243 = vmatpush.bf16.msra.mxu0 %v220
    %244 = vmatmul.bf16.gmra.mxu0 %v81
    %v245 = vpop.f32.mrf.mxu0
    %v246 = vadd.f32 0.0, %v245
    %v247 = vpop.f32.mrf.mxu0
    %v248 = vadd.f32 0.0, %v247
    %249 = vmatmul.bf16.gmra.mxu0 %v82
    %v250 = vpop.f32.mrf.mxu0
    %v251 = vadd.f32 0.0, %v250
    %v252 = vpop.f32.mrf.mxu0
    %v253 = vadd.f32 0.0, %v252
    %254 = vmatmul.bf16.gmra.mxu0 %v83
    %v255 = vpop.f32.mrf.mxu0
    %v256 = vadd.f32 0.0, %v255
    %v257 = vpop.f32.mrf.mxu0
    %258 = vdwg.mxu0
    %vm264 = vcmask 1046528
    %v265 = vrot.slane %v246, 1
    %v266 = vrot.slane %v248, 1
    %v267 = vsel %vm264, %v265, %v266
    %v268 = vrot.slane %v251, 1
    %v269 = vsel %vm264, %v266, %v268
    %v270 = vrot.slane %v253, 1
    %v271 = vsel %vm264, %v268, %v270
    %v272 = vrot.slane %v256, 1
    %v273 = vsel %vm264, %v270, %v272
    %v279 = vadd.f32 %v158, %v267
    %v280 = vadd.f32 %v160, %v269
    %v281 = vadd.f32 %v163, %v271
    %v282 = vadd.f32 %v165, %v273
    %v283 = vadd.f32 %v168, %v272
    %s284 = scalar_lea.vmem [#allocation3], 128
    %v285 = vld [vmem:[%s284] sm:$0xf]
    %v286 = vld [vmem:[%s284 + $0x4] sm:$0xf]
    %v287 = vld [vmem:[%s284 + $0x8] sm:$0xf]
    %v288 = vld [vmem:[%s284 + $0xc] sm:$0xf]
    %v289 = vld [vmem:[%s284 + $0x10] sm:$0xf]
    %v290 = vld [vmem:[%s284 + $0x14] sm:$0xf]
    %v291 = vld [vmem:[%s284 + $0x18] sm:$0xf]
    %v292 = vld [vmem:[%s284 + $0x1c] sm:$0xf]
    %v293 = vld [vmem:[%s284 + $0x20] sm:$0xf]
    %v294 = vld [vmem:[%s284 + $0x24] sm:$0xf]
    %v295 = vld [vmem:[%s284 + $0x28] sm:$0xf]
    %v296 = vld [vmem:[%s284 + $0x2c] sm:$0xf]
    %v297 = vld [vmem:[%s284 + $0x30] sm:$0xf]
    %v298 = vld [vmem:[%s284 + $0x34] sm:$0xf]
    %v299 = vld [vmem:[%s284 + $0x38] sm:$0xf]
    %v300 = vld [vmem:[%s284 + $0x3c] sm:$0xf]
    %v317 = vunpack.c.l.b16 %v285
    %v318 = vunpack.c.l.b16 %v286
    %v319 = vunpack.c.l.b16 %v287
    %v320 = vunpack.c.l.b16 %v288
    %v321 = vunpack.c.l.b16 %v289
    %v322 = vunpack.c.l.b16 %v290
    %v323 = vunpack.c.l.b16 %v291
    %v324 = vunpack.c.l.b16 %v292
    %v325 = vunpack.c.l.b16 %v293
    %v326 = vunpack.c.l.b16 %v294
    %v327 = vunpack.c.l.b16 %v295
    %v328 = vunpack.c.l.b16 %v296
    %v329 = vunpack.c.l.b16 %v297
    %v330 = vunpack.c.l.b16 %v298
    %v331 = vunpack.c.l.b16 %v299
    %v332 = vunpack.c.l.b16 %v300
    %v333 = vpack.c.b16 %v318, %v317
    %v334 = vpack.c.b16 %v320, %v319
    %v335 = vpack.c.b16 %v322, %v321
    %v336 = vpack.c.b16 %v324, %v323
    %v337 = vpack.c.b16 %v326, %v325
    %v338 = vpack.c.b16 %v328, %v327
    %v339 = vpack.c.b16 %v330, %v329
    %v340 = vpack.c.b16 %v332, %v331
    %349 = vmatpush.bf16.msra.mxu0 %v340
    %350 = vmatpush.bf16.msra.mxu0 %v339
    %351 = vmatpush.bf16.msra.mxu0 %v338
    %352 = vmatpush.bf16.msra.mxu0 %v337
    %353 = vmatpush.bf16.msra.mxu0 %v336
    %354 = vmatpush.bf16.msra.mxu0 %v335
    %355 = vmatpush.bf16.msra.mxu0 %v334
    %356 = vmatpush.bf16.msra.mxu0 %v333
    %357 = vmatmul.bf16.gmra.mxu0 %v81
    %v358 = vpop.f32.mrf.mxu0
    %v359 = vadd.f32 0.0, %v358
    %v360 = vpop.f32.mrf.mxu0
    %v361 = vadd.f32 0.0, %v360
    %362 = vmatmul.bf16.gmra.mxu0 %v82
    %v363 = vpop.f32.mrf.mxu0
    %v364 = vadd.f32 0.0, %v363
    %v365 = vpop.f32.mrf.mxu0
    %v366 = vadd.f32 0.0, %v365
    %367 = vmatmul.bf16.gmra.mxu0 %v83
    %v368 = vpop.f32.mrf.mxu0
    %v369 = vadd.f32 0.0, %v368
    %v370 = vpop.f32.mrf.mxu0
    %371 = vdwg.mxu0
    %vm377 = vcmask 1045504
    %v378 = vrot.slane %v359, 2
    %v379 = vrot.slane %v361, 2
    %v380 = vsel %vm377, %v378, %v379
    %v381 = vrot.slane %v364, 2
    %v382 = vsel %vm377, %v379, %v381
    %v383 = vrot.slane %v366, 2
    %v384 = vsel %vm377, %v381, %v383
    %v385 = vrot.slane %v369, 2
    %v386 = vsel %vm377, %v383, %v385
    %v392 = vadd.f32 %v279, %v380
    %v393 = vadd.f32 %v280, %v382
    %v394 = vadd.f32 %v281, %v384
    %v395 = vadd.f32 %v282, %v386
    %v396 = vadd.f32 %v283, %v385
    %v397 = vld [vmem:[%s4] sm:$0x1]
    %v398 = vld [vmem:[%s4 + $0x1] sm:$0x1]
    %400 = vset.pattern.permute.xlu0 0
    %401 = vperm.xlu0 %400, %v71
    %v402 = vpop.permute.xlu0 %401
    %405 = vset.pattern.permute.xlu0 0
    %406 = vperm.xlu0 %405, %v72
    %v407 = vpop.permute.xlu0 %406
    %410 = vset.pattern.permute.xlu0 0
    %411 = vperm.xlu0 %410, %v73
    %v412 = vpop.permute.xlu0 %411
    %415 = vset.pattern.permute.xlu0 0
    %416 = vperm.xlu0 %415, %v74
    %v417 = vpop.permute.xlu0 %416
    %420 = vset.pattern.permute.xlu0 0
    %421 = vperm.xlu0 %420, %v75
    %v422 = vpop.permute.xlu0 %421
    %v424 = vmul.f32 %v392, %v402
    %v425 = vmul.f32 %v393, %v407
    %v426 = vmul.f32 %v394, %v412
    %v427 = vmul.f32 %v395, %v417
    %v428 = vmul.f32 %v396, %v422
    %v429 = vadd.f32 %v424, %v425
    %v430 = vadd.f32 %v429, %v426
    %v431 = vadd.f32 %v430, %v427
    %vm432 = vcmask 1043456
    %v433 = vsel %vm432, %v428, 0.0
    %v434 = vadd.f32 %v431, %v433
    %v435 = vrot.slane %v434, 4
    %v436 = vadd.f32 %v434, %v435
    %v437 = vrot.slane %v436, 2
    %v438 = vadd.f32 %v436, %v437
    %v439 = vrot.slane %v438, 1
    %v440 = vadd.f32 %v438, %v439
    %v441 = vld [vmem:[#allocation8] sm:$0xff]
    %v442 = vld [vmem:[#allocation8 + $0x8] sm:$0xff]
    %v443 = vld [vmem:[#allocation8 + $0x10] sm:$0xff]
    %v444 = vld [vmem:[#allocation8 + $0x18] sm:$0xff]
    %v445 = vld [vmem:[#allocation8 + $0x20] sm:$0xff]
    %v446 = vld [vmem:[#allocation8 + $0x28] sm:$0xff]
    %v447 = vld [vmem:[#allocation8 + $0x30] sm:$0xff]
    %v448 = vld [vmem:[#allocation8 + $0x38] sm:$0xff]
    %v449 = vld [vmem:[#allocation8 + $0x40] sm:$0xff]
    %v450 = vld [vmem:[#allocation8 + $0x48] sm:$0xff]
    %v451 = vld [vmem:[#allocation8 + $0x50] sm:$0xff]
    %v452 = vld [vmem:[#allocation8 + $0x58] sm:$0xff]
    %v453 = vld [vmem:[#allocation8 + $0x60] sm:$0xff]
    %v454 = vld [vmem:[#allocation8 + $0x68] sm:$0xff]
    %v455 = vld [vmem:[#allocation8 + $0x70] sm:$0xff]
    %v456 = vld [vmem:[#allocation8 + $0x78] sm:$0xff]
    %457 = vmatpush.msra.mxu0 %v456
    %458 = vmatpush.msra.mxu0 %v455
    %459 = vmatpush.msra.mxu0 %v454
    %460 = vmatpush.msra.mxu0 %v453
    %461 = vmatpush.msra.mxu0 %v452
    %462 = vmatpush.msra.mxu0 %v451
    %463 = vmatpush.msra.mxu0 %v450
    %464 = vmatpush.msra.mxu0 %v449
    %465 = vmatpush.msra.mxu0 %v448
    %466 = vmatpush.msra.mxu0 %v447
    %467 = vmatpush.msra.mxu0 %v446
    %468 = vmatpush.msra.mxu0 %v445
    %469 = vmatpush.msra.mxu0 %v444
    %470 = vmatpush.msra.mxu0 %v443
    %471 = vmatpush.msra.mxu0 %v442
    %472 = vmatpush.msra.mxu0 %v441
    %473 = vmatmul.f32.gmra.mxu0 %v440
    %v474 = vpop.f32.mrf.mxu0
    %v475 = vadd.f32 0.0, %v474
    %476 = vdwg.mxu0
    %v477 = vperm.slane %v475, 0
    %v478 = vsub.f32 %v392, %v477
    %v479 = vsub.f32 %v393, %v477
    %v480 = vsub.f32 %v394, %v477
    %v481 = vsub.f32 %v395, %v477
    %v482 = vsub.f32 %v396, %v477
    %v483 = vmul.f32 %v478, %v402
    %v484 = vmul.f32 %v479, %v407
    %v485 = vmul.f32 %v480, %v412
    %v486 = vmul.f32 %v481, %v417
    %v487 = vmul.f32 %v482, %v422
    %v488 = vmul.f32 %v483, %v483
    %v489 = vmul.f32 %v484, %v484
    %v490 = vmul.f32 %v485, %v485
    %v491 = vmul.f32 %v486, %v486
    %v492 = vmul.f32 %v487, %v487
    %v493 = vadd.f32 %v488, %v489
    %v494 = vadd.f32 %v493, %v490
    %v495 = vadd.f32 %v494, %v491
    %v496 = vsel %vm432, %v492, 0.0
    %v497 = vadd.f32 %v495, %v496
    %v498 = vrot.slane %v497, 4
    %v499 = vadd.f32 %v497, %v498
    %v500 = vrot.slane %v499, 2
    %v501 = vadd.f32 %v499, %v500
    %v502 = vrot.slane %v501, 1
    %v503 = vadd.f32 %v501, %v502
    %504 = vmatpush.msra.mxu0 %v456
    %505 = vmatpush.msra.mxu0 %v455
    %506 = vmatpush.msra.mxu0 %v454
    %507 = vmatpush.msra.mxu0 %v453
    %508 = vmatpush.msra.mxu0 %v452
    %509 = vmatpush.msra.mxu0 %v451
    %510 = vmatpush.msra.mxu0 %v450
    %511 = vmatpush.msra.mxu0 %v449
    %512 = vmatpush.msra.mxu0 %v448
    %513 = vmatpush.msra.mxu0 %v447
    %514 = vmatpush.msra.mxu0 %v446
    %515 = vmatpush.msra.mxu0 %v445
    %516 = vmatpush.msra.mxu0 %v444
    %517 = vmatpush.msra.mxu0 %v443
    %518 = vmatpush.msra.mxu0 %v442
    %519 = vmatpush.msra.mxu0 %v441
    %520 = vmatmul.f32.gmra.mxu0 %v503
    %v521 = vpop.f32.mrf.mxu0
    %v522 = vadd.f32 1e-05, %v521
    %523 = vdwg.mxu0
    %v524 = vrsqrt.pop %v522
    %v525 = vmul.f32 %v524, %v522
    %v526 = vmul.f32 %v525, %v524
    %v527 = vmul.f32 0.5, %v526
    %v528 = vsub.f32 1.5, %v527
    %v529 = vmul.f32 %v524, %v528
    %vm530 = vweird.f32 %v522
    %vm531 = vweird.f32 %v524
    %vm532 = vmor %vm530, %vm531
    %v533 = vsel %vm532, %v524, %v529
    %v534 = vperm.slane %v533, 0
    %v535 = vmul.f32 %v478, %v534
    %v536 = vmul.f32 %v479, %v534
    %v537 = vmul.f32 %v480, %v534
    %v538 = vmul.f32 %v481, %v534
    %v539 = vmul.f32 %v482, %v534
    %v540 = vperm.slane %v397, 0
    %v541 = vmul.f32 %v535, %v540
    %v542 = vmul.f32 %v536, %v540
    %v543 = vmul.f32 %v537, %v540
    %v544 = vmul.f32 %v538, %v540
    %v545 = vmul.f32 %v539, %v540
    %v546 = vperm.slane %v398, 0
    %v547 = vadd.f32 %v541, %v546
    %v548 = vadd.f32 %v542, %v546
    %v549 = vadd.f32 %v543, %v546
    %v550 = vadd.f32 %v544, %v546
    %v551 = vadd.f32 %v545, %v546
    %v552 = vmax.f32 %v547, 0.0
    %v553 = vmax.f32 %v548, 0.0
    %v554 = vmax.f32 %v549, 0.0
    %v555 = vmax.f32 %v550, 0.0
    %v556 = vmax.f32 %v551, 0.0
    %557 = vst [vmem:[#allocation2] sm:$0x1] 0.0
    %558 = vst [vmem:[#allocation2 + $0x25] sm:$0x1] 0.0
    %v559 = vmul.f32 %v552, %v402
    %v560 = vmul.f32 %v553, %v407
    %v561 = vmul.f32 %v554, %v412
    %v562 = vmul.f32 %v555, %v417
    %v563 = vmul.f32 %v556, %v422
    %564 = vst [vmem:[#allocation2 + $0x1] sm:$0xff] %v559
    %565 = vst [vmem:[#allocation2 + $0x9] sm:$0xff] %v560
    %566 = vst [vmem:[#allocation2 + $0x11] sm:$0xff] %v561
    %567 = vst [vmem:[#allocation2 + $0x19] sm:$0xff] %v562
    %568 = vst [vmem:[#allocation2 + $0x21] sm:$0xf] %v563
    %v569 = vld [vmem:[#allocation2] sm:$0xff]
    %v570 = vld [vmem:[#allocation2 + $0x8] sm:$0xff]
    %v571 = vld [vmem:[#allocation2 + $0x10] sm:$0xff]
    %v572 = vld [vmem:[#allocation2 + $0x18] sm:$0xff]
    %v573 = vld [vmem:[#allocation2 + $0x20] sm:$0x3f]
    %v574 = vpack.c.bf16 %v570, %v569
    %v575 = vpack.c.bf16 %v572, %v571
    %v576 = vpack.c.bf16 %v573, %v573
    %v577 = vld [vmem:[#allocation6] sm:$0xf]
    %v578 = vld [vmem:[#allocation6 + $0x4] sm:$0xf]
    %v579 = vld [vmem:[#allocation6 + $0x8] sm:$0xf]
    %v580 = vld [vmem:[#allocation6 + $0xc] sm:$0xf]
    %v581 = vld [vmem:[#allocation6 + $0x10] sm:$0xf]
    %v582 = vld [vmem:[#allocation6 + $0x14] sm:$0xf]
    %v583 = vld [vmem:[#allocation6 + $0x18] sm:$0xf]
    %v584 = vld [vmem:[#allocation6 + $0x1c] sm:$0xf]
    %v585 = vld [vmem:[#allocation6 + $0x20] sm:$0xf]
    %v586 = vld [vmem:[#allocation6 + $0x24] sm:$0xf]
    %v587 = vld [vmem:[#allocation6 + $0x28] sm:$0xf]
    %v588 = vld [vmem:[#allocation6 + $0x2c] sm:$0xf]
    %v589 = vld [vmem:[#allocation6 + $0x30] sm:$0xf]
    %v590 = vld [vmem:[#allocation6 + $0x34] sm:$0xf]
    %v591 = vld [vmem:[#allocation6 + $0x38] sm:$0xf]
    %v592 = vld [vmem:[#allocation6 + $0x3c] sm:$0xf]
    %v609 = vunpack.c.l.b16 %v577
    %v610 = vunpack.c.l.b16 %v578
    %v611 = vunpack.c.l.b16 %v579
    %v612 = vunpack.c.l.b16 %v580
    %v613 = vunpack.c.l.b16 %v581
    %v614 = vunpack.c.l.b16 %v582
    %v615 = vunpack.c.l.b16 %v583
    %v616 = vunpack.c.l.b16 %v584
    %v617 = vunpack.c.l.b16 %v585
    %v618 = vunpack.c.l.b16 %v586
    %v619 = vunpack.c.l.b16 %v587
    %v620 = vunpack.c.l.b16 %v588
    %v621 = vunpack.c.l.b16 %v589
    %v622 = vunpack.c.l.b16 %v590
    %v623 = vunpack.c.l.b16 %v591
    %v624 = vunpack.c.l.b16 %v592
    %v625 = vpack.c.b16 %v610, %v609
    %v626 = vpack.c.b16 %v612, %v611
    %v627 = vpack.c.b16 %v614, %v613
    %v628 = vpack.c.b16 %v616, %v615
    %v629 = vpack.c.b16 %v618, %v617
    %v630 = vpack.c.b16 %v620, %v619
    %v631 = vpack.c.b16 %v622, %v621
    %v632 = vpack.c.b16 %v624, %v623
    %641 = vmatpush.bf16.msra.mxu0 %v632
    %642 = vmatpush.bf16.msra.mxu0 %v631
    %643 = vmatpush.bf16.msra.mxu0 %v630
    %644 = vmatpush.bf16.msra.mxu0 %v629
    %645 = vmatpush.bf16.msra.mxu0 %v628
    %646 = vmatpush.bf16.msra.mxu0 %v627
    %647 = vmatpush.bf16.msra.mxu0 %v626
    %648 = vmatpush.bf16.msra.mxu0 %v625
    %649 = vmatmul.bf16.gmra.mxu0 %v574
    %v650 = vpop.f32.mrf.mxu0
    %v651 = vadd.f32 0.0, %v650
    %v652 = vpop.f32.mrf.mxu0
    %v653 = vadd.f32 0.0, %v652
    %654 = vmatmul.bf16.gmra.mxu0 %v575
    %v655 = vpop.f32.mrf.mxu0
    %v656 = vadd.f32 0.0, %v655
    %v657 = vpop.f32.mrf.mxu0
    %v658 = vadd.f32 0.0, %v657
    %659 = vmatmul.bf16.gmra.mxu0 %v576
    %v660 = vpop.f32.mrf.mxu0
    %v661 = vadd.f32 0.0, %v660
    %v662 = vpop.f32.mrf.mxu0
    %663 = vdwg.mxu0
    %s664 = scalar_lea.vmem [#allocation6], 64
    %v665 = vld [vmem:[%s664] sm:$0xf]
    %v666 = vld [vmem:[%s664 + $0x4] sm:$0xf]
    %v667 = vld [vmem:[%s664 + $0x8] sm:$0xf]
    %v668 = vld [vmem:[%s664 + $0xc] sm:$0xf]
    %v669 = vld [vmem:[%s664 + $0x10] sm:$0xf]
    %v670 = vld [vmem:[%s664 + $0x14] sm:$0xf]
    %v671 = vld [vmem:[%s664 + $0x18] sm:$0xf]
    %v672 = vld [vmem:[%s664 + $0x1c] sm:$0xf]
    %v673 = vld [vmem:[%s664 + $0x20] sm:$0xf]
    %v674 = vld [vmem:[%s664 + $0x24] sm:$0xf]
    %v675 = vld [vmem:[%s664 + $0x28] sm:$0xf]
    %v676 = vld [vmem:[%s664 + $0x2c] sm:$0xf]
    %v677 = vld [vmem:[%s664 + $0x30] sm:$0xf]
    %v678 = vld [vmem:[%s664 + $0x34] sm:$0xf]
    %v679 = vld [vmem:[%s664 + $0x38] sm:$0xf]
    %v680 = vld [vmem:[%s664 + $0x3c] sm:$0xf]
    %v697 = vunpack.c.l.b16 %v665
    %v698 = vunpack.c.l.b16 %v666
    %v699 = vunpack.c.l.b16 %v667
    %v700 = vunpack.c.l.b16 %v668
    %v701 = vunpack.c.l.b16 %v669
    %v702 = vunpack.c.l.b16 %v670
    %v703 = vunpack.c.l.b16 %v671
    %v704 = vunpack.c.l.b16 %v672
    %v705 = vunpack.c.l.b16 %v673
    %v706 = vunpack.c.l.b16 %v674
    %v707 = vunpack.c.l.b16 %v675
    %v708 = vunpack.c.l.b16 %v676
    %v709 = vunpack.c.l.b16 %v677
    %v710 = vunpack.c.l.b16 %v678
    %v711 = vunpack.c.l.b16 %v679
    %v712 = vunpack.c.l.b16 %v680
    %v713 = vpack.c.b16 %v698, %v697
    %v714 = vpack.c.b16 %v700, %v699
    %v715 = vpack.c.b16 %v702, %v701
    %v716 = vpack.c.b16 %v704, %v703
    %v717 = vpack.c.b16 %v706, %v705
    %v718 = vpack.c.b16 %v708, %v707
    %v719 = vpack.c.b16 %v710, %v709
    %v720 = vpack.c.b16 %v712, %v711
    %729 = vmatpush.bf16.msra.mxu0 %v720
    %730 = vmatpush.bf16.msra.mxu0 %v719
    %731 = vmatpush.bf16.msra.mxu0 %v718
    %732 = vmatpush.bf16.msra.mxu0 %v717
    %733 = vmatpush.bf16.msra.mxu0 %v716
    %734 = vmatpush.bf16.msra.mxu0 %v715
    %735 = vmatpush.bf16.msra.mxu0 %v714
    %736 = vmatpush.bf16.msra.mxu0 %v713
    %737 = vmatmul.bf16.gmra.mxu0 %v574
    %v738 = vpop.f32.mrf.mxu0
    %v739 = vadd.f32 0.0, %v738
    %v740 = vpop.f32.mrf.mxu0
    %v741 = vadd.f32 0.0, %v740
    %742 = vmatmul.bf16.gmra.mxu0 %v575
    %v743 = vpop.f32.mrf.mxu0
    %v744 = vadd.f32 0.0, %v743
    %v745 = vpop.f32.mrf.mxu0
    %v746 = vadd.f32 0.0, %v745
    %747 = vmatmul.bf16.gmra.mxu0 %v576
    %v748 = vpop.f32.mrf.mxu0
    %v749 = vadd.f32 0.0, %v748
    %v750 = vpop.f32.mrf.mxu0
    %751 = vdwg.mxu0
    %v757 = vrot.slane %v739, 1
    %v758 = vrot.slane %v741, 1
    %v759 = vsel %vm264, %v757, %v758
    %v760 = vrot.slane %v744, 1
    %v761 = vsel %vm264, %v758, %v760
    %v762 = vrot.slane %v746, 1
    %v763 = vsel %vm264, %v760, %v762
    %v764 = vrot.slane %v749, 1
    %v765 = vsel %vm264, %v762, %v764
    %v771 = vadd.f32 %v651, %v759
    %v772 = vadd.f32 %v653, %v761
    %v773 = vadd.f32 %v656, %v763
    %v774 = vadd.f32 %v658, %v765
    %v775 = vadd.f32 %v661, %v764
    %s776 = scalar_lea.vmem [#allocation6], 128
    %v777 = vld [vmem:[%s776] sm:$0xf]
    %v778 = vld [vmem:[%s776 + $0x4] sm:$0xf]
    %v779 = vld [vmem:[%s776 + $0x8] sm:$0xf]
    %v780 = vld [vmem:[%s776 + $0xc] sm:$0xf]
    %v781 = vld [vmem:[%s776 + $0x10] sm:$0xf]
    %v782 = vld [vmem:[%s776 + $0x14] sm:$0xf]
    %v783 = vld [vmem:[%s776 + $0x18] sm:$0xf]
    %v784 = vld [vmem:[%s776 + $0x1c] sm:$0xf]
    %v785 = vld [vmem:[%s776 + $0x20] sm:$0xf]
    %v786 = vld [vmem:[%s776 + $0x24] sm:$0xf]
    %v787 = vld [vmem:[%s776 + $0x28] sm:$0xf]
    %v788 = vld [vmem:[%s776 + $0x2c] sm:$0xf]
    %v789 = vld [vmem:[%s776 + $0x30] sm:$0xf]
    %v790 = vld [vmem:[%s776 + $0x34] sm:$0xf]
    %v791 = vld [vmem:[%s776 + $0x38] sm:$0xf]
    %v792 = vld [vmem:[%s776 + $0x3c] sm:$0xf]
    %v809 = vunpack.c.l.b16 %v777
    %v810 = vunpack.c.l.b16 %v778
    %v811 = vunpack.c.l.b16 %v779
    %v812 = vunpack.c.l.b16 %v780
    %v813 = vunpack.c.l.b16 %v781
    %v814 = vunpack.c.l.b16 %v782
    %v815 = vunpack.c.l.b16 %v783
    %v816 = vunpack.c.l.b16 %v784
    %v817 = vunpack.c.l.b16 %v785
    %v818 = vunpack.c.l.b16 %v786
    %v819 = vunpack.c.l.b16 %v787
    %v820 = vunpack.c.l.b16 %v788
    %v821 = vunpack.c.l.b16 %v789
    %v822 = vunpack.c.l.b16 %v790
    %v823 = vunpack.c.l.b16 %v791
    %v824 = vunpack.c.l.b16 %v792
    %v825 = vpack.c.b16 %v810, %v809
    %v826 = vpack.c.b16 %v812, %v811
    %v827 = vpack.c.b16 %v814, %v813
    %v828 = vpack.c.b16 %v816, %v815
    %v829 = vpack.c.b16 %v818, %v817
    %v830 = vpack.c.b16 %v820, %v819
    %v831 = vpack.c.b16 %v822, %v821
    %v832 = vpack.c.b16 %v824, %v823
    %841 = vmatpush.bf16.msra.mxu0 %v832
    %842 = vmatpush.bf16.msra.mxu0 %v831
    %843 = vmatpush.bf16.msra.mxu0 %v830
    %844 = vmatpush.bf16.msra.mxu0 %v829
    %845 = vmatpush.bf16.msra.mxu0 %v828
    %846 = vmatpush.bf16.msra.mxu0 %v827
    %847 = vmatpush.bf16.msra.mxu0 %v826
    %848 = vmatpush.bf16.msra.mxu0 %v825
    %849 = vmatmul.bf16.gmra.mxu0 %v574
    %v850 = vpop.f32.mrf.mxu0
    %v851 = vadd.f32 0.0, %v850
    %v852 = vpop.f32.mrf.mxu0
    %v853 = vadd.f32 0.0, %v852
    %854 = vmatmul.bf16.gmra.mxu0 %v575
    %v855 = vpop.f32.mrf.mxu0
    %v856 = vadd.f32 0.0, %v855
    %v857 = vpop.f32.mrf.mxu0
    %v858 = vadd.f32 0.0, %v857
    %859 = vmatmul.bf16.gmra.mxu0 %v576
    %v860 = vpop.f32.mrf.mxu0
    %v861 = vadd.f32 0.0, %v860
    %v862 = vpop.f32.mrf.mxu0
    %863 = vdwg.mxu0
    %v869 = vrot.slane %v851, 2
    %v870 = vrot.slane %v853, 2
    %v871 = vsel %vm377, %v869, %v870
    %v872 = vrot.slane %v856, 2
    %v873 = vsel %vm377, %v870, %v872
    %v874 = vrot.slane %v858, 2
    %v875 = vsel %vm377, %v872, %v874
    %v876 = vrot.slane %v861, 2
    %v877 = vsel %vm377, %v874, %v876
    %v883 = vadd.f32 %v771, %v871
    %v884 = vadd.f32 %v772, %v873
    %v885 = vadd.f32 %v773, %v875
    %v886 = vadd.f32 %v774, %v877
    %v887 = vadd.f32 %v775, %v876
    %v888 = vld [vmem:[%s4 + $0x2] sm:$0x1]
    %v889 = vld [vmem:[%s4 + $0x3] sm:$0x1]
    %v890 = vmul.f32 %v883, %v402
    %v891 = vmul.f32 %v884, %v407
    %v892 = vmul.f32 %v885, %v412
    %v893 = vmul.f32 %v886, %v417
    %v894 = vmul.f32 %v887, %v422
    %v895 = vadd.f32 %v890, %v891
    %v896 = vadd.f32 %v895, %v892
    %v897 = vadd.f32 %v896, %v893
    %v898 = vsel %vm432, %v894, 0.0
    %v899 = vadd.f32 %v897, %v898
    %v900 = vrot.slane %v899, 4
    %v901 = vadd.f32 %v899, %v900
    %v902 = vrot.slane %v901, 2
    %v903 = vadd.f32 %v901, %v902
    %v904 = vrot.slane %v903, 1
    %v905 = vadd.f32 %v903, %v904
    %v906 = vld [vmem:[#allocation8] sm:$0xff]
    %v907 = vld [vmem:[#allocation8 + $0x8] sm:$0xff]
    %v908 = vld [vmem:[#allocation8 + $0x10] sm:$0xff]
    %v909 = vld [vmem:[#allocation8 + $0x18] sm:$0xff]
    %v910 = vld [vmem:[#allocation8 + $0x20] sm:$0xff]
    %v911 = vld [vmem:[#allocation8 + $0x28] sm:$0xff]
    %v912 = vld [vmem:[#allocation8 + $0x30] sm:$0xff]
    %v913 = vld [vmem:[#allocation8 + $0x38] sm:$0xff]
    %v914 = vld [vmem:[#allocation8 + $0x40] sm:$0xff]
    %v915 = vld [vmem:[#allocation8 + $0x48] sm:$0xff]
    %v916 = vld [vmem:[#allocation8 + $0x50] sm:$0xff]
    %v917 = vld [vmem:[#allocation8 + $0x58] sm:$0xff]
    %v918 = vld [vmem:[#allocation8 + $0x60] sm:$0xff]
    %v919 = vld [vmem:[#allocation8 + $0x68] sm:$0xff]
    %v920 = vld [vmem:[#allocation8 + $0x70] sm:$0xff]
    %v921 = vld [vmem:[#allocation8 + $0x78] sm:$0xff]
    %922 = vmatpush.msra.mxu0 %v921
    %923 = vmatpush.msra.mxu0 %v920
    %924 = vmatpush.msra.mxu0 %v919
    %925 = vmatpush.msra.mxu0 %v918
    %926 = vmatpush.msra.mxu0 %v917
    %927 = vmatpush.msra.mxu0 %v916
    %928 = vmatpush.msra.mxu0 %v915
    %929 = vmatpush.msra.mxu0 %v914
    %930 = vmatpush.msra.mxu0 %v913
    %931 = vmatpush.msra.mxu0 %v912
    %932 = vmatpush.msra.mxu0 %v911
    %933 = vmatpush.msra.mxu0 %v910
    %934 = vmatpush.msra.mxu0 %v909
    %935 = vmatpush.msra.mxu0 %v908
    %936 = vmatpush.msra.mxu0 %v907
    %937 = vmatpush.msra.mxu0 %v906
    %938 = vmatmul.f32.gmra.mxu0 %v905
    %v939 = vpop.f32.mrf.mxu0
    %v940 = vadd.f32 0.0, %v939
    %941 = vdwg.mxu0
    %v942 = vperm.slane %v940, 0
    %v943 = vsub.f32 %v883, %v942
    %v944 = vsub.f32 %v884, %v942
    %v945 = vsub.f32 %v885, %v942
    %v946 = vsub.f32 %v886, %v942
    %v947 = vsub.f32 %v887, %v942
    %v948 = vmul.f32 %v943, %v402
    %v949 = vmul.f32 %v944, %v407
    %v950 = vmul.f32 %v945, %v412
    %v951 = vmul.f32 %v946, %v417
    %v952 = vmul.f32 %v947, %v422
    %v953 = vmul.f32 %v948, %v948
    %v954 = vmul.f32 %v949, %v949
    %v955 = vmul.f32 %v950, %v950
    %v956 = vmul.f32 %v951, %v951
    %v957 = vmul.f32 %v952, %v952
    %v958 = vadd.f32 %v953, %v954
    %v959 = vadd.f32 %v958, %v955
    %v960 = vadd.f32 %v959, %v956
    %v961 = vsel %vm432, %v957, 0.0
    %v962 = vadd.f32 %v960, %v961
    %v963 = vrot.slane %v962, 4
    %v964 = vadd.f32 %v962, %v963
    %v965 = vrot.slane %v964, 2
    %v966 = vadd.f32 %v964, %v965
    %v967 = vrot.slane %v966, 1
    %v968 = vadd.f32 %v966, %v967
    %969 = vmatpush.msra.mxu0 %v921
    %970 = vmatpush.msra.mxu0 %v920
    %971 = vmatpush.msra.mxu0 %v919
    %972 = vmatpush.msra.mxu0 %v918
    %973 = vmatpush.msra.mxu0 %v917
    %974 = vmatpush.msra.mxu0 %v916
    %975 = vmatpush.msra.mxu0 %v915
    %976 = vmatpush.msra.mxu0 %v914
    %977 = vmatpush.msra.mxu0 %v913
    %978 = vmatpush.msra.mxu0 %v912
    %979 = vmatpush.msra.mxu0 %v911
    %980 = vmatpush.msra.mxu0 %v910
    %981 = vmatpush.msra.mxu0 %v909
    %982 = vmatpush.msra.mxu0 %v908
    %983 = vmatpush.msra.mxu0 %v907
    %984 = vmatpush.msra.mxu0 %v906
    %985 = vmatmul.f32.gmra.mxu0 %v968
    %v986 = vpop.f32.mrf.mxu0
    %v987 = vadd.f32 1e-05, %v986
    %988 = vdwg.mxu0
    %v989 = vrsqrt.pop %v987
    %v990 = vmul.f32 %v989, %v987
    %v991 = vmul.f32 %v990, %v989
    %v992 = vmul.f32 0.5, %v991
    %v993 = vsub.f32 1.5, %v992
    %v994 = vmul.f32 %v989, %v993
    %vm995 = vweird.f32 %v987
    %vm996 = vweird.f32 %v989
    %vm997 = vmor %vm995, %vm996
    %v998 = vsel %vm997, %v989, %v994
    %v999 = vperm.slane %v998, 0
    %v1000 = vmul.f32 %v943, %v999
    %v1001 = vmul.f32 %v944, %v999
    %v1002 = vmul.f32 %v945, %v999
    %v1003 = vmul.f32 %v946, %v999
    %v1004 = vmul.f32 %v947, %v999
    %v1005 = vperm.slane %v888, 0
    %v1006 = vmul.f32 %v1000, %v1005
    %v1007 = vmul.f32 %v1001, %v1005
    %v1008 = vmul.f32 %v1002, %v1005
    %v1009 = vmul.f32 %v1003, %v1005
    %v1010 = vmul.f32 %v1004, %v1005
    %v1011 = vperm.slane %v889, 0
    %v1012 = vadd.f32 %v1006, %v1011
    %v1013 = vadd.f32 %v1007, %v1011
    %v1014 = vadd.f32 %v1008, %v1011
    %v1015 = vadd.f32 %v1009, %v1011
    %v1016 = vadd.f32 %v1010, %v1011
    %v1022 = vrot.slane %v76, 1
    %v1023 = vrot.slane %v77, 1
    %v1024 = vsel %vm264, %v1022, %v1023
    %v1025 = vrot.slane %v78, 1
    %v1026 = vsel %vm264, %v1023, %v1025
    %v1027 = vrot.slane %v79, 1
    %v1028 = vsel %vm264, %v1025, %v1027
    %v1029 = vrot.slane %v80, 1
    %v1030 = vsel %vm264, %v1027, %v1029
    %v1036 = vadd.f32 %v1012, %v1024
    %v1037 = vadd.f32 %v1013, %v1026
    %v1038 = vadd.f32 %v1014, %v1028
    %v1039 = vadd.f32 %v1015, %v1030
    %v1040 = vadd.f32 %v1016, %v1029
    %v1041 = vmax.f32 %v1036, 0.0
    %v1042 = vmax.f32 %v1037, 0.0
    %v1043 = vmax.f32 %v1038, 0.0
    %v1044 = vmax.f32 %v1039, 0.0
    %v1045 = vmax.f32 %v1040, 0.0
    %1046 = vst [vmem:[#allocation9] sm:$0xff] %v1041
    %1047 = vst [vmem:[#allocation9 + $0x8] sm:$0xff] %v1042
    %1048 = vst [vmem:[#allocation9 + $0x10] sm:$0xff] %v1043
    %1049 = vst [vmem:[#allocation9 + $0x18] sm:$0xff] %v1044
    %1050 = vst [vmem:[#allocation9 + $0x20] sm:$0xf] %v1045
    // Predicated region
    $region38: #{tpu_custom_call.1} parent=1 // pred_check
      _
    $region39: #{tpu_custom_call.1} parent=1 // pred_check_branch
      %1052 = sbr.rel (0) target = $region41
    $region40: #{tpu_custom_call.1} parent=1 // pred_region
      %1054 = vsyncadd [#allocation5], 0
      %s1055 = sshll.u32 [#allocation9], 4
      %s1056 = int_to_ptr.vmem [resolvable:$true] %s1055
      %s1057 = sshll.u32 %s6, 4
      %s1058 = int_to_ptr.hbm [resolvable:$true] %s1057
      %1063 = dma.vmem_to_hbm [thread:$0]  %s1056, 640, %s1058, [#allocation5], 128, 128, 8
    $region41: #{tpu_custom_call.1} parent=1 // pred_fallthru
      _
    // Predicated region
    $region42: #{tpu_custom_call.1} parent=1 // pred_check
      _
    $region43: #{tpu_custom_call.1} parent=1 // pred_check_branch
      %1065 = sbr.rel (0) target = $region45
    $region44: #{tpu_custom_call.1} parent=1 // pred_region
      %1067 = dma.done [#allocation5], 640
    $region45: #{tpu_custom_call.1} parent=1 // pred_fallthru
      _
    %1068 = vsyncpa [#allocation4], 1
    %1069 = vsyncpa [#allocation7], 1
    %1070 = vsyncpa [#allocation5], 1

</llo_original>
